<compile_context>
chip_gen: v5e
topology: v5e:2x2
jax: 0.10.0
libtpu: 0.0.40
codegen_flags: <defaults>
</compile_context>

<pallas_src>
import functools

import jax
import jax.numpy as jnp
from jax import lax
from jax.experimental import pallas as pl
from jax.experimental.pallas import tpu as pltpu


# ----------------------------------------------------------------------------
# Pass 1: row normalization (cosine-similarity prep), done once.
# ----------------------------------------------------------------------------
def _normalize_kernel(z_ref, zn_ref, *, eps: float):
    z = z_ref[...].astype(jnp.float32)
    norm = jnp.sqrt(jnp.sum(z * z, axis=-1, keepdims=True))
    zn_ref[...] = (z / jnp.maximum(norm, jnp.float32(eps))).astype(zn_ref.dtype)


# ----------------------------------------------------------------------------
# Pass 2: tiled similarity + online logsumexp cross-entropy.
# ----------------------------------------------------------------------------
def _simclr_tiles_kernel(zrow_ref, zcol_ref, zpos_ref, loss_ref,
                         sim_ref, m_ref, l_ref, pos_ref,
                         *, temperature: float, block_rows: int):
    i = pl.program_id(0)
    k = pl.program_id(1)
    inv_t = jnp.float32(1.0 / temperature)

    @pl.when(k == 0)
    def _init():
        m_ref[...] = jnp.full_like(m_ref, -jnp.inf)
        l_ref[...] = jnp.zeros_like(l_ref)
        # positive pair: row r pairs with row (r + B) mod N, delivered by the
        # rolled BlockSpec -> plain row-wise dot on the VPU (O(TM*D)), no
        # N x N mask needed.
        zr = zrow_ref[...].astype(jnp.float32)
        zp = zpos_ref[...].astype(jnp.float32)
        pos_ref[...] = jnp.sum(zr * zp, axis=-1, keepdims=True) * inv_t

    # (TM, TK) similarity tile on the MXU; contract dim 1 of both operands so
    # no transpose of the column block is materialized.
    sim_ref[...] = lax.dot_general(
        zrow_ref[...], zcol_ref[...],
        dimension_numbers=(((1,), (1,)), ((), ())),
        preferred_element_type=jnp.float32) * inv_t

    # Self-similarity mask only on tiles that intersect the diagonal.
    @pl.when(i == k)
    def _mask_diag():
        r = lax.broadcasted_iota(jnp.int32, (block_rows, block_rows), 0)
        c = lax.broadcasted_iota(jnp.int32, (block_rows, block_rows), 1)
        sim_ref[...] = jnp.where(r == c, jnp.float32(-jnp.inf), sim_ref[...])

    # Online logsumexp update.
    s = sim_ref[...]
    m_prev = m_ref[...]
    m_new = jnp.maximum(m_prev, jnp.max(s, axis=-1, keepdims=True))
    alpha = jnp.exp(m_prev - m_new)            # exp(-inf) -> 0 on first tile
    l_ref[...] = alpha * l_ref[...] + jnp.sum(jnp.exp(s - m_new),
                                              axis=-1, keepdims=True)
    m_ref[...] = m_new

    @pl.when(k == pl.num_programs(1) - 1)
    def _finalize():
        pos = pos_ref[...]
        m = m_ref[...]
        l = l_ref[...]
        # logits row = [pos_r, all off-diagonal entries of row r] (the positive
        # appears again among the "negatives", exactly as in the torch code).
        # CE with target 0:  loss_r = log(exp(pos) + sum exp(off-diag)) - pos
        loss_ref[...] = m + jnp.log(jnp.exp(pos - m) + l) - pos


# ----------------------------------------------------------------------------
# Wrapper
# ----------------------------------------------------------------------------
def simclr_loss(z_i: jax.Array, z_j: jax.Array, temperature: float = 0.5,
                *, block_rows: int | None = None,
                mxu_dtype=jnp.float32) -> jax.Array:
    """NT-Xent loss matching the PyTorch SimCLR_Loss forward.

    mxu_dtype=jnp.bfloat16 is an optional accuracy/throughput knob: the
    normalized embeddings (and hence the MXU operands) are stored in bf16
    while all softmax math stays in fp32.
    """
    assert z_i.shape == z_j.shape and z_i.ndim == 2
    batch_size, dim = z_i.shape
    n = 2 * batch_size

    if block_rows is None:
        for cand in (256, 128, 64, 32, 16, 8):
            if batch_size % cand == 0:
                block_rows = cand
                break
    if block_rows is None or batch_size % block_rows != 0 or block_rows % 8 != 0:
        # TODO(synk): pad the batch to a multiple of 8 to lift this restriction.
        raise ValueError("batch_size must be a multiple of 8 for the tiled kernel")

    nb = n // block_rows                # row/col blocks in the grid
    half = batch_size // block_rows     # block offset of the positive partner

    z = jnp.concatenate([z_i, z_j], axis=0)   # (N, D)

    # Pass 1: normalize rows once.
    zn = pl.pallas_call(
        functools.partial(_normalize_kernel, eps=1e-8),
        out_shape=jax.ShapeDtypeStruct((n, dim), mxu_dtype),
        grid=(nb,),
        in_specs=[pl.BlockSpec((block_rows, dim), lambda i: (i, 0))],
        out_specs=pl.BlockSpec((block_rows, dim), lambda i: (i, 0)),
        compiler_params=pltpu.CompilerParams(dimension_semantics=("parallel",)),
    )(z)

    # Pass 2: tiled similarity + online logsumexp cross-entropy.
    kernel = functools.partial(_simclr_tiles_kernel,
                               temperature=temperature,
                               block_rows=block_rows)

    elt = jnp.dtype(mxu_dtype).itemsize
    cost = pl.CostEstimate(
        flops=2 * n * n * dim,
        transcendentals=n * n,
        bytes_accessed=n * dim * elt * (nb + 2) + n * 4,
    )

    per_row_loss = pl.pallas_call(
        kernel,
        out_shape=jax.ShapeDtypeStruct((n, 1), jnp.float32),
        grid_spec=pltpu.PrefetchScalarGridSpec(
            num_scalar_prefetch=0,
            grid=(nb, nb),                                   # (rows, cols=reduction)
            in_specs=[
                pl.BlockSpec((block_rows, dim), lambda i, k: (i, 0)),            # rows
                pl.BlockSpec((block_rows, dim), lambda i, k: (k, 0)),            # cols
                pl.BlockSpec((block_rows, dim),
                             lambda i, k: ((i + half) % nb, 0)),                 # positives
            ],
            out_specs=pl.BlockSpec((block_rows, 1), lambda i, k: (i, 0)),
            scratch_shapes=[
                pltpu.VMEM((block_rows, block_rows), jnp.float32),   # sim tile
                pltpu.VMEM((block_rows, 1), jnp.float32),            # running max
                pltpu.VMEM((block_rows, 1), jnp.float32),            # running sum
                pltpu.VMEM((block_rows, 1), jnp.float32),            # positives
            ]),
        compiler_params=pltpu.CompilerParams(
            dimension_semantics=("parallel", "arbitrary"),
            vmem_limit_bytes=64 * 1024 * 1024),
        cost_estimate=cost,
    )(zn, zn, zn)

    return jnp.sum(per_row_loss) / jnp.float32(n)


# ----------------------------------------------------------------------------
# Pure-JAX reference mirroring the PyTorch module.
# ----------------------------------------------------------------------------
def _simclr_loss_ref(z_i, z_j, temperature=0.5):
    b = z_i.shape[0]
    n = 2 * b
    z = jnp.concatenate([z_i, z_j], axis=0).astype(jnp.float32)
    norm = jnp.maximum(jnp.linalg.norm(z, axis=-1, keepdims=True), 1e-8)
    zn = z / norm
    sim = (zn @ zn.T) / temperature
    sim = jnp.where(jnp.eye(n, dtype=bool), -jnp.inf, sim)
    pos = jnp.concatenate([jnp.diagonal(sim, b), jnp.diagonal(sim, -b)])[:, None]
    rowmax = jnp.max(sim, axis=-1, keepdims=True)
    denom = jnp.exp(pos - rowmax) + jnp.sum(jnp.exp(sim - rowmax), axis=-1,
                                            keepdims=True)
    loss_r = rowmax + jnp.log(denom) - pos
    return jnp.sum(loss_r) / n


if __name__ == "__main__":
    key = jax.random.PRNGKey(0)
    k1, k2 = jax.random.split(key)
    batch, dim = 64, 128                      # small; exercises a 2x2 tile grid
    z_i = jax.random.normal(k1, (batch, dim), dtype=jnp.float32)
    z_j = jax.random.normal(k2, (batch, dim), dtype=jnp.float32)

    loss = simclr_loss(z_i, z_j, temperature=0.5)
    jax.block_until_ready(loss)

    ref = _simclr_loss_ref(z_i, z_j, temperature=0.5)
    assert jnp.allclose(loss, ref, rtol=1e-4, atol=1e-4), (loss, ref)

    print("KERNEL_OK")
</pallas_src>

<mosaic_0001>
module attributes {stable_mosaic.version = 11 : i64} {
  func.func @_normalize_kernel(%arg0: i32, %arg1: memref<64x128xf32, #tpu.memory_space<vmem>>, %arg2: memref<64x128xf32, #tpu.memory_space<vmem>>) attributes {dimension_semantics = [#tpu.dimension_semantics<parallel>], iteration_bounds = array<i64: 2>, scalar_prefetch = 0 : i64, scratch_operands = 0 : i64, tpu.core_type = #tpu.core_type<tc>, window_params = [{transform_indices = @transform_0, window_bounds = array<i64: 64, 128>}, {transform_indices = @transform_1, window_bounds = array<i64: 64, 128>}]} {
    %c0 = arith.constant 0 : index
    %c0_0 = arith.constant 0 : index
    %0 = vector.load %arg1[%c0, %c0_0] : memref<64x128xf32, #tpu.memory_space<vmem>>, vector<64x128xf32>
    %1 = arith.mulf %0, %0 : vector<64x128xf32>
    %cst = arith.constant dense<0.000000e+00> : vector<64xf32>
    %2 = vector.multi_reduction <add>, %1, %cst [1] : vector<64x128xf32> to vector<64xf32>
    %3 = vector.shape_cast %2 : vector<64xf32> to vector<64x1xf32>
    %4 = math.sqrt %3 : vector<64x1xf32>
    %cst_1 = arith.constant 9.99999993E-9 : f32
    %5 = vector.broadcast %cst_1 : f32 to vector<64x1xf32>
    %6 = arith.maximumf %4, %5 : vector<64x1xf32>
    %7 = vector.broadcast %6 : vector<64x1xf32> to vector<64x128xf32>
    %8 = arith.divf %0, %7 : vector<64x128xf32>
    %c0_2 = arith.constant 0 : index
    %c0_3 = arith.constant 0 : index
    %9 = vector.load %arg2[%c0_2, %c0_3] : memref<64x128xf32, #tpu.memory_space<vmem>>, vector<64x128xf32>
    tpu.vector_store %arg2[%c0_2, %c0_3], %8 {strides = array<i32>} : memref<64x128xf32, #tpu.memory_space<vmem>>, vector<64x128xf32>,
    return
  }
  func.func @transform_0(%arg0: i32) -> (i32, i32) {
    %c0_i32 = arith.constant 0 : i32
    %c0_i32_0 = arith.constant 0 : i32
    return %arg0, %c0_i32 : i32, i32
  }
  func.func @transform_1(%arg0: i32) -> (i32, i32) {
    %c0_i32 = arith.constant 0 : i32
    %c0_i32_0 = arith.constant 0 : i32
    return %arg0, %c0_i32 : i32, i32
  }
}

</mosaic_0001>

<llo_original>
// kernel: tpu_custom_call.1
$region0: #{tpu_custom_call.1}
  #allocation0 [shape = 'u32[]', space=smem, size = 0x4, offset = 0x4, fixed_abs, tag = 'smem constant byte address 0x4 - core index']
  #allocation1 [shape = 'u32[72,128]{1,0:T(1,128)}', space=vmem, size = 0x9000, scoped, tag = 'internal scratch']
  %s0 = inlined_call_operand.hbm [shape: f32[128,128], index: 0, kind: input, shape index: {}]
  %s1 = inlined_call_operand.hbm [shape: f32[128,128], index: 1, kind: output, shape index: {}]
  %s2 = sld [smem:[#allocation0]]
  $region41: #{tpu_custom_call.1} parent=0
    _
  %s4 = ssub.s32 1, %s2
  %s5 = scalar_select 0, %s4, %s2
  $region1: #{tpu_custom_call.1} parent=0
    #allocation2 [shape = 'u8[65536]{0}', space=vmem, size = 0x10000, scoped, tag = 'input window, operand 0']
    #allocation3 [shape = 's32[2]{0}', space=sflag, size = 0x8, scoped, tag = 'scoped memory for tpu_custom_call.1']
    #allocation4 [shape = 's32[2]{0}', space=sflag, size = 0x8, scoped, tag = 'scoped memory for tpu_custom_call.1']
    #allocation5 [shape = 'u8[65536]{0}', space=vmem, size = 0x10000, scoped, tag = 'output window, operand 0']
    %6 = vsyncpa [#allocation3], 0
    %s7 = scalar_lea.sflag [#allocation3], 1
    %8 = vsyncpa %s7, 0
    %9 = vsyncpa [#allocation4], 0
    %s10 = scalar_lea.sflag [#allocation4], 1
    %11 = vsyncpa %s10, 0
    loop: start=0, step=1, limit=4
    $region2: #{tpu_custom_call.1} parent=1 // loop_pre_header
      _
    $region3: #{tpu_custom_call.1} parent=1 // loop_header
      %s13 = sphi 0, %s17
      %p14 = scmp.ge.s32.totalorder %s13, 4
      %s23 = sphi 0, %s25
      %s26 = sphi 0, %s23
      %s27 = sphi 0, %s26
      %s43 = sphi 0, %s27
      %s49 = sphi 0, %s51
      %s52 = sphi 0, %s49
      %s53 = sphi 0, %s52
      %s69 = sphi 0, %s53
    $region4: #{tpu_custom_call.1} parent=1 // loop_header_branch
      %16 = sbr.rel (%p14) target = $region8
    $region5: #{tpu_custom_call.1} parent=1 // loop_body
      %s18 = ssub.s32 %s13, 1
      %s19 = ssub.s32 %s13, 2
      %s20 = sadd.s32 %s13, 1
      %s21 = ssub.s32 %s13, %s20
      %p22 = scmp.eq.s32.totalorder %s21, 0
      %s24 = sadd.s32 %s23, 1
      %s25 = scalar_select %p22, %s23, %s24
      %p28 = pneg %p22
      %p29 = scmp.eq.s32.totalorder %s13, 1
      %p30 = por %p28, %p29
      %p31 = scmp.ne.s32.totalorder %s23, %s26
      %p32 = scmp.eq.s32.totalorder %s13, 0
      %p33 = por %p31, %p32
      %p34 = scmp.ne.s32.totalorder %s23, %s26
      %p35 = scmp.eq.s32.totalorder %s18, 1
      %p36 = por %p34, %p35
      %p37 = scmp.ne.s32.totalorder %s26, %s27
      %p38 = scmp.eq.s32.totalorder %s18, 0
      %p39 = por %p37, %p38
      %p40 = scmp.ne.s32.totalorder %s26, %s27
      %p41 = scmp.eq.s32.totalorder %s19, 1
      %p42 = por %p40, %p41
      %p44 = scmp.ne.s32.totalorder %s27, %s43
      %p45 = scmp.eq.s32.totalorder %s19, 0
      %p46 = por %p44, %p45
      %s47 = ssub.s32 %s13, %s20
      %p48 = scmp.eq.s32.totalorder %s47, 0
      %s50 = sadd.s32 %s49, 1
      %s51 = scalar_select %p48, %s49, %s50
      %p54 = pneg %p48
      %p55 = scmp.eq.s32.totalorder %s13, 1
      %p56 = por %p54, %p55
      %p57 = scmp.ne.s32.totalorder %s49, %s52
      %p58 = scmp.eq.s32.totalorder %s13, 0
      %p59 = por %p57, %p58
      %p60 = scmp.ne.s32.totalorder %s49, %s52
      %p61 = scmp.eq.s32.totalorder %s18, 1
      %p62 = por %p60, %p61
      %p63 = scmp.ne.s32.totalorder %s52, %s53
      %p64 = scmp.eq.s32.totalorder %s18, 0
      %p65 = por %p63, %p64
      %p66 = scmp.ne.s32.totalorder %s52, %s53
      %p67 = scmp.eq.s32.totalorder %s19, 1
      %p68 = por %p66, %p67
      %p70 = scmp.ne.s32.totalorder %s53, %s69
      %p71 = scmp.eq.s32.totalorder %s19, 0
      %p72 = por %p70, %p71
      %p73 = scmp.le.s32.totalorder 1, %s13
      %p74 = scmp.lt.s32.totalorder %s13, 3
      %p75 = pnand %p73, %p74
      %p76 = pneg %p75
      // Predicated region
      $region9: #{tpu_custom_call.1} parent=5 // pred_check
        _
      $region10: #{tpu_custom_call.1} parent=5 // pred_check_branch
        %78 = sbr.rel (%p75) target = $region12
      $region11: #{tpu_custom_call.1} parent=5 // pred_region
        %s79 = ssub.s32 %s13, 1
      $region12: #{tpu_custom_call.1} parent=5 // pred_fallthru
        _
      %p80 = scmp.lt.s32.totalorder %s13, 2
      // Predicated region
      $region13: #{tpu_custom_call.1} parent=5 // pred_check
        %p81 = pneg %p80
      $region14: #{tpu_custom_call.1} parent=5 // pred_check_branch
        %83 = sbr.rel (%p81) target = $region16
      $region15: #{tpu_custom_call.1} parent=5 // pred_region
        // Predicated region
        $region17: #{tpu_custom_call.1} parent=15 // pred_check
          %p84 = pneg %p33
        $region18: #{tpu_custom_call.1} parent=15 // pred_check_branch
          %86 = sbr.rel (%p84) target = $region20
        $region19: #{tpu_custom_call.1} parent=15 // pred_region
          %s87 = sand.u32 %s23, 1
          %s88 = scalar_lea.sflag [#allocation3], %s87
          %s89 = sand.u32 %s23, 1
          %s90 = smul.addr %s89, 64
          %s91 = scalar_lea.vmem [#allocation2], %s90
          %s92 = smul.u32 8, %s13
          %94 = vsyncadd %s88, 0
          %s95 = smul.addr %s92, 8
          %s96 = scalar_lea.hbm %s0, %s95
          %s97 = sshll.u32 %s96, 4
          %s98 = int_to_ptr.hbm [resolvable:$true] %s97
          %s99 = sshll.u32 %s91, 4
          %s100 = int_to_ptr.vmem [resolvable:$true] %s99
          %105 = dma.hbm_to_vmem [thread:$0]  %s98, 1024, %s100, %s88, 128, 128, 8
        $region20: #{tpu_custom_call.1} parent=15 // pred_fallthru
          _
      $region16: #{tpu_custom_call.1} parent=5 // pred_fallthru
        _
      %p106 = scmp.le.s32.totalorder 1, %s13
      %p107 = scmp.lt.s32.totalorder %s13, 3
      %p108 = pnand %p106, %p107
      %p109 = pneg %p108
      // Predicated region
      $region21: #{tpu_custom_call.1} parent=5 // pred_check
        _
      $region22: #{tpu_custom_call.1} parent=5 // pred_check_branch
        %111 = sbr.rel (%p108) target = $region24
      $region23: #{tpu_custom_call.1} parent=5 // pred_region
        %s112 = ssub.s32 %s13, 1
        %s113 = sand.u32 %s26, 1
        %s114 = scalar_lea.sflag [#allocation3], %s113
        %s115 = sand.u32 %s26, 1
        %s116 = smul.addr %s115, 64
        %s117 = scalar_lea.vmem [#allocation2], %s116
        // Predicated region
        $region25: #{tpu_custom_call.1} parent=23 // pred_check
          %p118 = pneg %p39
        $region26: #{tpu_custom_call.1} parent=23 // pred_check_branch
          %120 = sbr.rel (%p118) target = $region28
        $region27: #{tpu_custom_call.1} parent=23 // pred_region
          %122 = dma.done %s114, 1024
        $region28: #{tpu_custom_call.1} parent=23 // pred_fallthru
          _
        %s123 = sand.u32 %s26, 1
        %s124 = scalar_lea.sflag [#allocation3], %s123
        %s125 = sand.u32 %s26, 1
        %s126 = smul.addr %s125, 64
        %s127 = scalar_lea.vmem [#allocation2], %s126
        %p128 = pneg %p39
        %p129 = pneg %p36
        %p130 = pneg %p65
        %p131 = pneg %p62
        %s132 = sand.u32 %s52, 1
        %s133 = scalar_lea.sflag [#allocation4], %s132
        %s134 = sand.u32 %s52, 1
        %s135 = smul.addr %s134, 64
        %s136 = scalar_lea.vmem [#allocation5], %s135
        %s137 = smul.u32 8, %s18
        %s138 = smul.u32 8, %s18
        %v139 = vld [vmem:[%s117] sm:$0xff]
        %v140 = vld [vmem:[%s117 + $0x8] sm:$0xff]
        %v141 = vld [vmem:[%s117 + $0x10] sm:$0xff]
        %v142 = vld [vmem:[%s117 + $0x18] sm:$0xff]
        %v143 = vld [vmem:[%s117 + $0x20] sm:$0xff]
        %v144 = vld [vmem:[%s117 + $0x28] sm:$0xff]
        %v145 = vld [vmem:[%s117 + $0x30] sm:$0xff]
        %v146 = vld [vmem:[%s117 + $0x38] sm:$0xff]
        %v147 = vmul.f32 %v139, %v139
        %v148 = vmul.f32 %v140, %v140
        %v149 = vmul.f32 %v141, %v141
        %v150 = vmul.f32 %v142, %v142
        %v151 = vmul.f32 %v143, %v143
        %v152 = vmul.f32 %v144, %v144
        %v153 = vmul.f32 %v145, %v145
        %v154 = vmul.f32 %v146, %v146
        %155 = vadd.xlane.f32.xlu0 %v147
        %v156 = vpop.xlane.xlu0 %155
        %157 = vadd.xlane.f32.xlu0 %v148
        %v158 = vpop.xlane.xlu0 %157
        %159 = vadd.xlane.f32.xlu0 %v149
        %v160 = vpop.xlane.xlu0 %159
        %161 = vadd.xlane.f32.xlu0 %v150
        %v162 = vpop.xlane.xlu0 %161
        %163 = vadd.xlane.f32.xlu0 %v151
        %v164 = vpop.xlane.xlu0 %163
        %165 = vadd.xlane.f32.xlu0 %v152
        %v166 = vpop.xlane.xlu0 %165
        %167 = vadd.xlane.f32.xlu0 %v153
        %v168 = vpop.xlane.xlu0 %167
        %169 = vadd.xlane.f32.xlu0 %v154
        %v170 = vpop.xlane.xlu0 %169
        %v171 = vrsqrt.pop %v156
        %v172 = vmul.f32 %v171, %v156
        %v173 = vmul.f32 %v172, %v171
        %v174 = vmul.f32 0.5, %v173
        %v175 = vsub.f32 1.5, %v174
        %v176 = vmul.f32 %v171, %v175
        %v177 = vmul.f32 %v156, %v176
        %vm178 = vcmp.eq.f32.partialorder %v156, inf
        %v179 = vsel %vm178, %v156, %v177
        %vm180 = vcmp.eq.f32.partialorder %v156, 0.0
        %v181 = vand.u32 %v156, 2147483648
        %v182 = vsel %vm180, %v181, %v179
        %v183 = vrsqrt.pop %v158
        %v184 = vmul.f32 %v183, %v158
        %v185 = vmul.f32 %v184, %v183
        %v186 = vmul.f32 0.5, %v185
        %v187 = vsub.f32 1.5, %v186
        %v188 = vmul.f32 %v183, %v187
        %v189 = vmul.f32 %v158, %v188
        %vm190 = vcmp.eq.f32.partialorder %v158, inf
        %v191 = vsel %vm190, %v158, %v189
        %vm192 = vcmp.eq.f32.partialorder %v158, 0.0
        %v193 = vand.u32 %v158, 2147483648
        %v194 = vsel %vm192, %v193, %v191
        %v195 = vrsqrt.pop %v160
        %v196 = vmul.f32 %v195, %v160
        %v197 = vmul.f32 %v196, %v195
        %v198 = vmul.f32 0.5, %v197
        %v199 = vsub.f32 1.5, %v198
        %v200 = vmul.f32 %v195, %v199
        %v201 = vmul.f32 %v160, %v200
        %vm202 = vcmp.eq.f32.partialorder %v160, inf
        %v203 = vsel %vm202, %v160, %v201
        %vm204 = vcmp.eq.f32.partialorder %v160, 0.0
        %v205 = vand.u32 %v160, 2147483648
        %v206 = vsel %vm204, %v205, %v203
        %v207 = vrsqrt.pop %v162
        %v208 = vmul.f32 %v207, %v162
        %v209 = vmul.f32 %v208, %v207
        %v210 = vmul.f32 0.5, %v209
        %v211 = vsub.f32 1.5, %v210
        %v212 = vmul.f32 %v207, %v211
        %v213 = vmul.f32 %v162, %v212
        %vm214 = vcmp.eq.f32.partialorder %v162, inf
        %v215 = vsel %vm214, %v162, %v213
        %vm216 = vcmp.eq.f32.partialorder %v162, 0.0
        %v217 = vand.u32 %v162, 2147483648
        %v218 = vsel %vm216, %v217, %v215
        %v219 = vrsqrt.pop %v164
        %v220 = vmul.f32 %v219, %v164
        %v221 = vmul.f32 %v220, %v219
        %v222 = vmul.f32 0.5, %v221
        %v223 = vsub.f32 1.5, %v222
        %v224 = vmul.f32 %v219, %v223
        %v225 = vmul.f32 %v164, %v224
        %vm226 = vcmp.eq.f32.partialorder %v164, inf
        %v227 = vsel %vm226, %v164, %v225
        %vm228 = vcmp.eq.f32.partialorder %v164, 0.0
        %v229 = vand.u32 %v164, 2147483648
        %v230 = vsel %vm228, %v229, %v227
        %v231 = vrsqrt.pop %v166
        %v232 = vmul.f32 %v231, %v166
        %v233 = vmul.f32 %v232, %v231
        %v234 = vmul.f32 0.5, %v233
        %v235 = vsub.f32 1.5, %v234
        %v236 = vmul.f32 %v231, %v235
        %v237 = vmul.f32 %v166, %v236
        %vm238 = vcmp.eq.f32.partialorder %v166, inf
        %v239 = vsel %vm238, %v166, %v237
        %vm240 = vcmp.eq.f32.partialorder %v166, 0.0
        %v241 = vand.u32 %v166, 2147483648
        %v242 = vsel %vm240, %v241, %v239
        %v243 = vrsqrt.pop %v168
        %v244 = vmul.f32 %v243, %v168
        %v245 = vmul.f32 %v244, %v243
        %v246 = vmul.f32 0.5, %v245
        %v247 = vsub.f32 1.5, %v246
        %v248 = vmul.f32 %v243, %v247
        %v249 = vmul.f32 %v168, %v248
        %vm250 = vcmp.eq.f32.partialorder %v168, inf
        %v251 = vsel %vm250, %v168, %v249
        %vm252 = vcmp.eq.f32.partialorder %v168, 0.0
        %v253 = vand.u32 %v168, 2147483648
        %v254 = vsel %vm252, %v253, %v251
        %v255 = vrsqrt.pop %v170
        %v256 = vmul.f32 %v255, %v170
        %v257 = vmul.f32 %v256, %v255
        %v258 = vmul.f32 0.5, %v257
        %v259 = vsub.f32 1.5, %v258
        %v260 = vmul.f32 %v255, %v259
        %v261 = vmul.f32 %v170, %v260
        %vm262 = vcmp.eq.f32.partialorder %v170, inf
        %v263 = vsel %vm262, %v170, %v261
        %vm264 = vcmp.eq.f32.partialorder %v170, 0.0
        %v265 = vand.u32 %v170, 2147483648
        %v266 = vsel %vm264, %v265, %v263
        %v267 = vmax.f32 %v182, 1e-08
        %v268 = vmax.f32 %v194, 1e-08
        %v269 = vmax.f32 %v206, 1e-08
        %v270 = vmax.f32 %v218, 1e-08
        %v271 = vmax.f32 %v230, 1e-08
        %v272 = vmax.f32 %v242, 1e-08
        %v273 = vmax.f32 %v254, 1e-08
        %v274 = vmax.f32 %v266, 1e-08
        %v275 = vrcp.pop %v267
        %v276 = vmul.f32 %v267, %v275
        %v277 = vsub.f32 1.0, %v276
        %v278 = vmul.f32 %v275, %v277
        %v279 = vadd.f32 %v275, %v278
        %vm280 = vweird.f32 %v267
        %vm281 = vweird.f32 %v275
        %vm282 = vmor %vm280, %vm281
        %v283 = vsel %vm282, %v275, %v279
        %v284 = vand.u32 2147483647, %v267
        %vm285 = vcmp.eq.f32.partialorder %v284, 8.507059e+37
        %v286 = vand.u32 %v267, 2147483648
        %v287 = vor.u32 1.1754944e-38, %v286
        %v288 = vsel %vm285, %v287, %v283
        %v289 = vmul.f32 %v139, %v288
        %v290 = vrcp.pop %v268
        %v291 = vmul.f32 %v268, %v290
        %v292 = vsub.f32 1.0, %v291
        %v293 = vmul.f32 %v290, %v292
        %v294 = vadd.f32 %v290, %v293
        %vm295 = vweird.f32 %v268
        %vm296 = vweird.f32 %v290
        %vm297 = vmor %vm295, %vm296
        %v298 = vsel %vm297, %v290, %v294
        %v299 = vand.u32 2147483647, %v268
        %vm300 = vcmp.eq.f32.partialorder %v299, 8.507059e+37
        %v301 = vand.u32 %v268, 2147483648
        %v302 = vor.u32 1.1754944e-38, %v301
        %v303 = vsel %vm300, %v302, %v298
        %v304 = vmul.f32 %v140, %v303
        %v305 = vrcp.pop %v269
        %v306 = vmul.f32 %v269, %v305
        %v307 = vsub.f32 1.0, %v306
        %v308 = vmul.f32 %v305, %v307
        %v309 = vadd.f32 %v305, %v308
        %vm310 = vweird.f32 %v269
        %vm311 = vweird.f32 %v305
        %vm312 = vmor %vm310, %vm311
        %v313 = vsel %vm312, %v305, %v309
        %v314 = vand.u32 2147483647, %v269
        %vm315 = vcmp.eq.f32.partialorder %v314, 8.507059e+37
        %v316 = vand.u32 %v269, 2147483648
        %v317 = vor.u32 1.1754944e-38, %v316
        %v318 = vsel %vm315, %v317, %v313
        %v319 = vmul.f32 %v141, %v318
        %v320 = vrcp.pop %v270
        %v321 = vmul.f32 %v270, %v320
        %v322 = vsub.f32 1.0, %v321
        %v323 = vmul.f32 %v320, %v322
        %v324 = vadd.f32 %v320, %v323
        %vm325 = vweird.f32 %v270
        %vm326 = vweird.f32 %v320
        %vm327 = vmor %vm325, %vm326
        %v328 = vsel %vm327, %v320, %v324
        %v329 = vand.u32 2147483647, %v270
        %vm330 = vcmp.eq.f32.partialorder %v329, 8.507059e+37
        %v331 = vand.u32 %v270, 2147483648
        %v332 = vor.u32 1.1754944e-38, %v331
        %v333 = vsel %vm330, %v332, %v328
        %v334 = vmul.f32 %v142, %v333
        %v335 = vrcp.pop %v271
        %v336 = vmul.f32 %v271, %v335
        %v337 = vsub.f32 1.0, %v336
        %v338 = vmul.f32 %v335, %v337
        %v339 = vadd.f32 %v335, %v338
        %vm340 = vweird.f32 %v271
        %vm341 = vweird.f32 %v335
        %vm342 = vmor %vm340, %vm341
        %v343 = vsel %vm342, %v335, %v339
        %v344 = vand.u32 2147483647, %v271
        %vm345 = vcmp.eq.f32.partialorder %v344, 8.507059e+37
        %v346 = vand.u32 %v271, 2147483648
        %v347 = vor.u32 1.1754944e-38, %v346
        %v348 = vsel %vm345, %v347, %v343
        %v349 = vmul.f32 %v143, %v348
        %v350 = vrcp.pop %v272
        %v351 = vmul.f32 %v272, %v350
        %v352 = vsub.f32 1.0, %v351
        %v353 = vmul.f32 %v350, %v352
        %v354 = vadd.f32 %v350, %v353
        %vm355 = vweird.f32 %v272
        %vm356 = vweird.f32 %v350
        %vm357 = vmor %vm355, %vm356
        %v358 = vsel %vm357, %v350, %v354
        %v359 = vand.u32 2147483647, %v272
        %vm360 = vcmp.eq.f32.partialorder %v359, 8.507059e+37
        %v361 = vand.u32 %v272, 2147483648
        %v362 = vor.u32 1.1754944e-38, %v361
        %v363 = vsel %vm360, %v362, %v358
        %v364 = vmul.f32 %v144, %v363
        %v365 = vrcp.pop %v273
        %v366 = vmul.f32 %v273, %v365
        %v367 = vsub.f32 1.0, %v366
        %v368 = vmul.f32 %v365, %v367
        %v369 = vadd.f32 %v365, %v368
        %vm370 = vweird.f32 %v273
        %vm371 = vweird.f32 %v365
        %vm372 = vmor %vm370, %vm371
        %v373 = vsel %vm372, %v365, %v369
        %v374 = vand.u32 2147483647, %v273
        %vm375 = vcmp.eq.f32.partialorder %v374, 8.507059e+37
        %v376 = vand.u32 %v273, 2147483648
        %v377 = vor.u32 1.1754944e-38, %v376
        %v378 = vsel %vm375, %v377, %v373
        %v379 = vmul.f32 %v145, %v378
        %v380 = vrcp.pop %v274
        %v381 = vmul.f32 %v274, %v380
        %v382 = vsub.f32 1.0, %v381
        %v383 = vmul.f32 %v380, %v382
        %v384 = vadd.f32 %v380, %v383
        %vm385 = vweird.f32 %v274
        %vm386 = vweird.f32 %v380
        %vm387 = vmor %vm385, %vm386
        %v388 = vsel %vm387, %v380, %v384
        %v389 = vand.u32 2147483647, %v274
        %vm390 = vcmp.eq.f32.partialorder %v389, 8.507059e+37
        %v391 = vand.u32 %v274, 2147483648
        %v392 = vor.u32 1.1754944e-38, %v391
        %v393 = vsel %vm390, %v392, %v388
        %v394 = vmul.f32 %v146, %v393
        %395 = vst [vmem:[%s136] sm:$0xff] %v289
        %396 = vst [vmem:[%s136 + $0x8] sm:$0xff] %v304
        %397 = vst [vmem:[%s136 + $0x10] sm:$0xff] %v319
        %398 = vst [vmem:[%s136 + $0x18] sm:$0xff] %v334
        %399 = vst [vmem:[%s136 + $0x20] sm:$0xff] %v349
        %400 = vst [vmem:[%s136 + $0x28] sm:$0xff] %v364
        %401 = vst [vmem:[%s136 + $0x30] sm:$0xff] %v379
        %402 = vst [vmem:[%s136 + $0x38] sm:$0xff] %v394
        %s403 = sand.u32 %s52, 1
        %s404 = scalar_lea.sflag [#allocation4], %s403
        %s405 = sand.u32 %s52, 1
        %s406 = smul.addr %s405, 64
        %s407 = scalar_lea.vmem [#allocation5], %s406
        // Predicated region
        $region29: #{tpu_custom_call.1} parent=23 // pred_check
          %p408 = pneg %p62
        $region30: #{tpu_custom_call.1} parent=23 // pred_check_branch
          %410 = sbr.rel (%p408) target = $region32
        $region31: #{tpu_custom_call.1} parent=23 // pred_region
          %s411 = smul.u32 8, %s18
          %413 = vsyncadd %s404, 0
          %s414 = smul.addr %s411, 8
          %s415 = scalar_lea.hbm %s1, %s414
          %s416 = sshll.u32 %s407, 4
          %s417 = int_to_ptr.vmem [resolvable:$true] %s416
          %s418 = sshll.u32 %s415, 4
          %s419 = int_to_ptr.hbm [resolvable:$true] %s418
          %424 = dma.vmem_to_hbm [thread:$0]  %s417, 1024, %s419, %s404, 128, 128, 8
        $region32: #{tpu_custom_call.1} parent=23 // pred_fallthru
          _
      $region24: #{tpu_custom_call.1} parent=5 // pred_fallthru
        _
      %p425 = scmp.le.s32.totalorder 2, %s13
      // Predicated region
      $region33: #{tpu_custom_call.1} parent=5 // pred_check
        %p426 = pneg %p425
      $region34: #{tpu_custom_call.1} parent=5 // pred_check_branch
        %428 = sbr.rel (%p426) target = $region36
      $region35: #{tpu_custom_call.1} parent=5 // pred_region
        %s429 = ssub.s32 %s13, 2
        // Predicated region
        $region37: #{tpu_custom_call.1} parent=35 // pred_check
          %p430 = pneg %p68
        $region38: #{tpu_custom_call.1} parent=35 // pred_check_branch
          %432 = sbr.rel (%p430) target = $region40
        $region39: #{tpu_custom_call.1} parent=35 // pred_region
          %s433 = sand.u32 %s53, 1
          %s434 = scalar_lea.sflag [#allocation4], %s433
          %s435 = sand.u32 %s53, 1
          %s436 = smul.addr %s435, 64
          %s437 = scalar_lea.vmem [#allocation5], %s436
          %439 = dma.done %s434, 1024
        $region40: #{tpu_custom_call.1} parent=35 // pred_fallthru
          _
      $region36: #{tpu_custom_call.1} parent=5 // pred_fallthru
        _
    $region6: #{tpu_custom_call.1} parent=1 // loop_footer
      %s17 = sadd.s32 1, %s13
    $region7: #{tpu_custom_call.1} parent=1 // loop_footer_branch
      %12 = sbr.rel target = $region3
    $region8: #{tpu_custom_call.1} parent=1 // loop_exit
      _
    %440 = vsyncpa [#allocation3], 1
    %s441 = scalar_lea.sflag [#allocation3], 1
    %442 = vsyncpa %s441, 1
    %443 = vsyncpa [#allocation4], 1
    %s444 = scalar_lea.sflag [#allocation4], 1
    %445 = vsyncpa %s444, 1

</llo_original>
